<compile_context>
chip_gen: v5e
topology: v5e:2x2
jax: 0.10.0
libtpu: 0.0.40
codegen_flags: <defaults>
</compile_context>

<pallas_src>
import jax
import jax.numpy as jnp
from jax.experimental import pallas as pl
from jax.experimental.pallas import tpu as pltpu

LANES = 128
SUBLANES = 8


def behavioral_regularization(layer_outputs_source,
                              layer_outputs_target,
                              regularization_weight=0.01,
                              *,
                              tile_rows=4096,
                              num_splits=2):
    """Scalar: reg_weight * ||target - stop_grad(source)||_2^2 over all elems."""
    assert layer_outputs_source.shape == layer_outputs_target.shape

    # Match torch's .detach() on the source feature maps.
    src = jax.lax.stop_gradient(layer_outputs_source)
    tgt = layer_outputs_target

    n = src.size
    # Packed-sublane granularity of the narrowest dtype (f32:8, bf16:16, i8:32).
    min_item = min(src.dtype.itemsize, tgt.dtype.itemsize)
    sub = SUBLANES * max(1, 4 // int(min_item))

    # Lane-dense (rows, 128) slab. Zero-copy (bitcast reshape) when n % 128 == 0.
    rem = (-n) % LANES
    rows = (n + rem) // LANES

    def to_slab(x):
        x = x.reshape(-1)
        if rem:
            # TODO(synk): rare path (numel not a multiple of 128) costs one HBM
            # copy of the input; feature maps almost never hit it.
            x = jnp.pad(x, (0, rem))  # zeros contribute nothing to the sum
        return x.reshape(rows, LANES)

    src_s = to_slab(src)
    tgt_s = to_slab(tgt)

    # Tile sizing: as large as the smallest scoped-VMEM budget comfortably
    # allows, multiple of the packed sublane tile, shrunk for small inputs.
    tile_rows = max(sub, (int(tile_rows) // sub) * sub)
    tile_rows = min(tile_rows, pl.cdiv(rows, sub) * sub)

    total_blocks = pl.cdiv(rows, tile_rows)
    num_splits = max(1, min(int(num_splits), total_blocks))
    steps = pl.cdiv(total_blocks, num_splits)

    # Blocks strictly below `full_blocks` contain only valid rows (no masking).
    full_blocks = rows // tile_rows

    def kernel(src_ref, tgt_ref, out_ref):
        c = pl.program_id(0)
        i = pl.program_id(1)
        blk = c * steps + i

        @pl.when(i == 0)
        def _():
            out_ref[...] = jnp.zeros_like(out_ref)

        def accum(d):
            sq = d * d
            # (tile_rows, 128) -> (tile_rows//8, 8, 128); reduce the leading
            # axis only: pure vreg-wise VPU adds into the resident (8, 128)
            # output accumulator (single cross-lane reduce happens in wrapper).
            out_ref[...] += jnp.sum(
                sq.reshape(tile_rows // SUBLANES, SUBLANES, LANES), axis=0)

        d = tgt_ref[...].astype(jnp.float32) - src_ref[...].astype(jnp.float32)

        @pl.when(blk < full_blocks)
        def _():
            accum(d)

        @pl.when(blk >= full_blocks)
        def _():
            # Tail / out-of-range block: mask rows past the valid row count.
            row_ids = (jax.lax.broadcasted_iota(jnp.int32, (tile_rows, LANES), 0)
                       + blk * tile_rows)
            accum(jnp.where(row_ids < rows, d, 0.0))

    # Clamp the block index so a split's trailing (masked) steps never issue an
    # out-of-bounds DMA; their contribution is zeroed by the row mask.
    def in_map(c, i):
        return (jnp.minimum(c * steps + i, total_blocks - 1), 0)

    bytes_accessed = (n * (src.dtype.itemsize + tgt.dtype.itemsize)
                      + num_splits * SUBLANES * LANES * 4)

    out = pl.pallas_call(
        kernel,
        out_shape=jax.ShapeDtypeStruct((num_splits * SUBLANES, LANES),
                                       jnp.float32),
        grid_spec=pltpu.PrefetchScalarGridSpec(
            num_scalar_prefetch=0,
            grid=(num_splits, steps),
            in_specs=[
                pl.BlockSpec((tile_rows, LANES), in_map),
                pl.BlockSpec((tile_rows, LANES), in_map),
            ],
            out_specs=pl.BlockSpec((SUBLANES, LANES), lambda c, i: (c, 0)),
        ),
        compiler_params=pltpu.CompilerParams(
            dimension_semantics=("parallel", "arbitrary")),
        cost_estimate=pl.CostEstimate(
            flops=3 * n, transcendentals=0, bytes_accessed=bytes_accessed),
    )(src_s, tgt_s)

    # Weight applied outside the kernel: supports traced weights, no recompile.
    return jnp.asarray(regularization_weight, jnp.float32) * jnp.sum(out)


if __name__ == "__main__":
    key = jax.random.PRNGKey(0)
    k1, k2, k3, k4, k5, k6 = jax.random.split(key, 6)

    reg_weight = 0.01

    # --- f32 NCHW feature maps: batch=2, channels=4, spatial=16x16 ---
    shape = (2, 4, 16, 16)
    src_f32 = jax.random.normal(k1, shape, dtype=jnp.float32)
    tgt_f32 = jax.random.normal(k2, shape, dtype=jnp.float32)

    out = behavioral_regularization(src_f32, tgt_f32,
                                    regularization_weight=reg_weight)
    out = jax.block_until_ready(out)
    ref = reg_weight * jnp.sum((tgt_f32 - src_f32) ** 2)
    assert jnp.allclose(out, ref, rtol=1e-5, atol=1e-5), (out, ref)

    # --- bf16 feature maps streamed in native dtype (no wrapper upcast) ---
    shape2 = (2, 8, 32, 32)
    src_bf = jax.random.normal(k3, shape2, dtype=jnp.float32).astype(jnp.bfloat16)
    tgt_bf = jax.random.normal(k4, shape2, dtype=jnp.float32).astype(jnp.bfloat16)

    out2 = behavioral_regularization(src_bf, tgt_bf,
                                     regularization_weight=reg_weight)
    out2 = jax.block_until_ready(out2)
    ref2 = reg_weight * jnp.sum(
        (tgt_bf.astype(jnp.float32) - src_bf.astype(jnp.float32)) ** 2)
    assert jnp.allclose(out2, ref2, rtol=1e-4, atol=1e-5), (out2, ref2)

    # --- ragged shape exercising in-kernel tail masking, multi-block grid,
    #     uneven split (clamped OOB block) and the parallel outer axis ---
    shape3 = (2, 3, 50, 50)   # 15000 elems: not a multiple of 128*tile_rows
    src_r = jax.random.normal(k5, shape3, dtype=jnp.float32)
    tgt_r = jax.random.normal(k6, shape3, dtype=jnp.float32)

    out3 = behavioral_regularization(src_r, tgt_r,
                                     regularization_weight=reg_weight,
                                     tile_rows=24, num_splits=2)
    out3 = jax.block_until_ready(out3)
    ref3 = reg_weight * jnp.sum((tgt_r - src_r) ** 2)
    assert jnp.allclose(out3, ref3, rtol=1e-5, atol=1e-4), (out3, ref3)

    print("KERNEL_OK")
</pallas_src>

<mosaic_0001>
module attributes {stable_mosaic.version = 11 : i64} {
  func.func @kernel(%arg0: i32, %arg1: i32, %arg2: memref<16x128xf32, #tpu.memory_space<vmem>>, %arg3: memref<16x128xf32, #tpu.memory_space<vmem>>, %arg4: memref<8x128xf32, #tpu.memory_space<vmem>>) attributes {dimension_semantics = [#tpu.dimension_semantics<parallel>, #tpu.dimension_semantics<arbitrary>], iteration_bounds = array<i64: 1, 1>, scalar_prefetch = 0 : i64, scratch_operands = 0 : i64, tpu.core_type = #tpu.core_type<tc>, window_params = [{transform_indices = @transform_0, window_bounds = array<i64: 16, 128>}, {transform_indices = @transform_1, window_bounds = array<i64: 16, 128>}, {transform_indices = @transform_2, window_bounds = array<i64: 8, 128>}]} {
    %c1_i32 = arith.constant 1 : i32
    %0 = arith.muli %arg0, %c1_i32 : i32
    %1 = arith.addi %0, %arg1 : i32
    %c0_i32 = arith.constant 0 : i32
    %2 = arith.cmpi eq, %arg1, %c0_i32 : i32
    %3 = arith.extui %2 : i1 to i32
    %c0_i32_0 = arith.constant 0 : i32
    %4 = arith.cmpi ne, %3, %c0_i32_0 : i32
    scf.if %4 {
      %cst = arith.constant 0.000000e+00 : f32
      %14 = vector.broadcast %cst : f32 to vector<8x128xf32>
      %c0_8 = arith.constant 0 : index
      %c0_9 = arith.constant 0 : index
      %15 = vector.load %arg4[%c0_8, %c0_9] : memref<8x128xf32, #tpu.memory_space<vmem>>, vector<8x128xf32>
      tpu.vector_store %arg4[%c0_8, %c0_9], %14 {strides = array<i32>} : memref<8x128xf32, #tpu.memory_space<vmem>>, vector<8x128xf32>,
    } else {
    }
    %c0 = arith.constant 0 : index
    %c0_1 = arith.constant 0 : index
    %5 = vector.load %arg3[%c0, %c0_1] : memref<16x128xf32, #tpu.memory_space<vmem>>, vector<16x128xf32>
    %c0_2 = arith.constant 0 : index
    %c0_3 = arith.constant 0 : index
    %6 = vector.load %arg2[%c0_2, %c0_3] : memref<16x128xf32, #tpu.memory_space<vmem>>, vector<16x128xf32>
    %7 = arith.subf %5, %6 : vector<16x128xf32>
    %c1_i32_4 = arith.constant 1 : i32
    %8 = arith.cmpi slt, %1, %c1_i32_4 : i32
    %9 = arith.extui %8 : i1 to i32
    %c0_i32_5 = arith.constant 0 : i32
    %10 = arith.cmpi ne, %9, %c0_i32_5 : i32
    scf.if %10 {
      %14 = arith.mulf %7, %7 : vector<16x128xf32>
      %c0_8 = arith.constant 0 : index
      %c0_9 = arith.constant 0 : index
      %15 = vector.load %arg4[%c0_8, %c0_9] : memref<8x128xf32, #tpu.memory_space<vmem>>, vector<8x128xf32>
      %16 = vector.shape_cast %14 : vector<16x128xf32> to vector<2x8x128xf32>
      %cst = arith.constant dense<0.000000e+00> : vector<8x128xf32>
      %17 = vector.multi_reduction <add>, %16, %cst [0] : vector<2x8x128xf32> to vector<8x128xf32>
      %18 = arith.addf %15, %17 : vector<8x128xf32>
      %c0_10 = arith.constant 0 : index
      %c0_11 = arith.constant 0 : index
      %19 = vector.load %arg4[%c0_10, %c0_11] : memref<8x128xf32, #tpu.memory_space<vmem>>, vector<8x128xf32>
      tpu.vector_store %arg4[%c0_10, %c0_11], %18 {strides = array<i32>} : memref<8x128xf32, #tpu.memory_space<vmem>>, vector<8x128xf32>,
    } else {
    }
    %c1_i32_6 = arith.constant 1 : i32
    %11 = arith.cmpi sge, %1, %c1_i32_6 : i32
    %12 = arith.extui %11 : i1 to i32
    %c0_i32_7 = arith.constant 0 : i32
    %13 = arith.cmpi ne, %12, %c0_i32_7 : i32
    scf.if %13 {
      %14 = tpu.iota {dimensions = array<i32: 0>} : vector<16x128xi32>
      %c16_i32 = arith.constant 16 : i32
      %15 = arith.muli %1, %c16_i32 : i32
      %16 = vector.broadcast %15 : i32 to vector<16x128xi32>
      %17 = arith.addi %14, %16 : vector<16x128xi32>
      %c16_i32_8 = arith.constant 16 : i32
      %18 = vector.broadcast %c16_i32_8 : i32 to vector<16x128xi32>
      %19 = arith.cmpi slt, %17, %18 : vector<16x128xi32>
      %cst = arith.constant 0.000000e+00 : f32
      %20 = vector.broadcast %cst : f32 to vector<16x128xf32>
      %21 = arith.select %19, %7, %20 : vector<16x128xi1>, vector<16x128xf32>
      %22 = arith.mulf %21, %21 : vector<16x128xf32>
      %c0_9 = arith.constant 0 : index
      %c0_10 = arith.constant 0 : index
      %23 = vector.load %arg4[%c0_9, %c0_10] : memref<8x128xf32, #tpu.memory_space<vmem>>, vector<8x128xf32>
      %24 = vector.shape_cast %22 : vector<16x128xf32> to vector<2x8x128xf32>
      %cst_11 = arith.constant dense<0.000000e+00> : vector<8x128xf32>
      %25 = vector.multi_reduction <add>, %24, %cst_11 [0] : vector<2x8x128xf32> to vector<8x128xf32>
      %26 = arith.addf %23, %25 : vector<8x128xf32>
      %c0_12 = arith.constant 0 : index
      %c0_13 = arith.constant 0 : index
      %27 = vector.load %arg4[%c0_12, %c0_13] : memref<8x128xf32, #tpu.memory_space<vmem>>, vector<8x128xf32>
      tpu.vector_store %arg4[%c0_12, %c0_13], %26 {strides = array<i32>} : memref<8x128xf32, #tpu.memory_space<vmem>>, vector<8x128xf32>,
    } else {
    }
    return
  }
  func.func @transform_0(%arg0: i32, %arg1: i32) -> (i32, i32) {
    %c1_i32 = arith.constant 1 : i32
    %0 = arith.muli %arg0, %c1_i32 : i32
    %1 = arith.addi %0, %arg1 : i32
    %c0_i32 = arith.constant 0 : i32
    %2 = arith.minsi %1, %c0_i32 : i32
    %c0_i32_0 = arith.constant 0 : i32
    %c0_i32_1 = arith.constant 0 : i32
    return %2, %c0_i32_0 : i32, i32
  }
  func.func @transform_1(%arg0: i32, %arg1: i32) -> (i32, i32) {
    %c1_i32 = arith.constant 1 : i32
    %0 = arith.muli %arg0, %c1_i32 : i32
    %1 = arith.addi %0, %arg1 : i32
    %c0_i32 = arith.constant 0 : i32
    %2 = arith.minsi %1, %c0_i32 : i32
    %c0_i32_0 = arith.constant 0 : i32
    %c0_i32_1 = arith.constant 0 : i32
    return %2, %c0_i32_0 : i32, i32
  }
  func.func @transform_2(%arg0: i32, %arg1: i32) -> (i32, i32) {
    %c0_i32 = arith.constant 0 : i32
    %c0_i32_0 = arith.constant 0 : i32
    return %arg0, %c0_i32 : i32, i32
  }
}

</mosaic_0001>

<llo_original>
// kernel: tpu_custom_call.1
$region0: #{tpu_custom_call.1}
  #allocation0 [shape = 'u32[]', space=smem, size = 0x4, offset = 0x4, fixed_abs, tag = 'smem constant byte address 0x4 - core index']
  #allocation1 [shape = 'u32[72,128]{1,0:T(1,128)}', space=vmem, size = 0x9000, scoped, tag = 'internal scratch']
  %s0 = inlined_call_operand.hbm [shape: f32[16,128], index: 0, kind: input, shape index: {}]
  %s1 = inlined_call_operand.hbm [shape: f32[16,128], index: 1, kind: input, shape index: {}]
  %s2 = inlined_call_operand.hbm [shape: f32[8,128], index: 2, kind: output, shape index: {}]
  %s3 = sld [smem:[#allocation0]]
  $region38: #{tpu_custom_call.1} parent=0
    _
  %s5 = ssub.s32 1, %s3
  %s6 = scalar_select 0, %s5, %s3
  $region1: #{tpu_custom_call.1} parent=0
    #allocation2 [shape = 'u8[8192]{0}', space=vmem, size = 0x2000, scoped, tag = 'input window, operand 0, single buffered']
    #allocation3 [shape = 's32[1]{0}', space=sflag, size = 0x4, scoped, tag = 'scoped memory for tpu_custom_call.1']
    #allocation4 [shape = 's32[1]{0}', space=sflag, size = 0x4, scoped, tag = 'scoped memory for tpu_custom_call.1']
    #allocation5 [shape = 'u8[8192]{0}', space=vmem, size = 0x2000, scoped, tag = 'input window, operand 1, single buffered']
    #allocation6 [shape = 's32[1]{0}', space=sflag, size = 0x4, scoped, tag = 'scoped memory for tpu_custom_call.1']
    #allocation7 [shape = 'u8[4096]{0}', space=vmem, size = 0x1000, scoped, tag = 'output window, operand 0, single buffered']
    %7 = vsyncpa [#allocation3], 0
    %8 = vsyncpa [#allocation6], 0
    %9 = vsyncpa [#allocation4], 0
    // Predicated region
    $region2: #{tpu_custom_call.1} parent=1 // pred_check
      _
    $region3: #{tpu_custom_call.1} parent=1 // pred_check_branch
      %11 = sbr.rel (0) target = $region5
    $region4: #{tpu_custom_call.1} parent=1 // pred_region
      %s12 = sadd.s32 0, 0
      %p13 = scmp.lt.s32.totalorder %s12, 0
      %s14 = scalar_select %p13, %s12, 0
      %s15 = smul.u32 2, %s14
      %17 = vsyncadd [#allocation3], 0
      %s18 = smul.addr %s15, 8
      %s19 = scalar_lea.hbm %s0, %s18
      %s20 = sshll.u32 %s19, 4
      %s21 = int_to_ptr.hbm [resolvable:$true] %s20
      %s22 = sshll.u32 [#allocation2], 4
      %s23 = int_to_ptr.vmem [resolvable:$true] %s22
      %28 = dma.hbm_to_vmem [thread:$0]  %s21, 256, %s23, [#allocation3], 128, 128, 8
    $region5: #{tpu_custom_call.1} parent=1 // pred_fallthru
      _
    // Predicated region
    $region6: #{tpu_custom_call.1} parent=1 // pred_check
      _
    $region7: #{tpu_custom_call.1} parent=1 // pred_check_branch
      %30 = sbr.rel (0) target = $region9
    $region8: #{tpu_custom_call.1} parent=1 // pred_region
      %s31 = sadd.s32 0, 0
      %p32 = scmp.lt.s32.totalorder %s31, 0
      %s33 = scalar_select %p32, %s31, 0
      %s34 = smul.u32 2, %s33
      %36 = vsyncadd [#allocation6], 0
      %s37 = smul.addr %s34, 8
      %s38 = scalar_lea.hbm %s1, %s37
      %s39 = sshll.u32 %s38, 4
      %s40 = int_to_ptr.hbm [resolvable:$true] %s39
      %s41 = sshll.u32 [#allocation5], 4
      %s42 = int_to_ptr.vmem [resolvable:$true] %s41
      %47 = dma.hbm_to_vmem [thread:$0]  %s40, 256, %s42, [#allocation6], 128, 128, 8
    $region9: #{tpu_custom_call.1} parent=1 // pred_fallthru
      _
    // Predicated region
    $region10: #{tpu_custom_call.1} parent=1 // pred_check
      _
    $region11: #{tpu_custom_call.1} parent=1 // pred_check_branch
      %49 = sbr.rel (0) target = $region13
    $region12: #{tpu_custom_call.1} parent=1 // pred_region
      %51 = dma.done [#allocation3], 256
    $region13: #{tpu_custom_call.1} parent=1 // pred_fallthru
      _
    // Predicated region
    $region14: #{tpu_custom_call.1} parent=1 // pred_check
      _
    $region15: #{tpu_custom_call.1} parent=1 // pred_check_branch
      %53 = sbr.rel (0) target = $region17
    $region16: #{tpu_custom_call.1} parent=1 // pred_region
      %55 = dma.done [#allocation6], 256
    $region17: #{tpu_custom_call.1} parent=1 // pred_fallthru
      _
    %s56 = sadd.s32 0, 0
    %p57 = scmp.lt.s32.totalorder %s56, 0
    %s58 = scalar_select %p57, %s56, 0
    %s59 = smul.u32 2, %s58
    %s60 = sadd.s32 0, 0
    %p61 = scmp.lt.s32.totalorder %s60, 0
    %s62 = scalar_select %p61, %s60, 0
    %s63 = smul.u32 2, %s62
    %s64 = sadd.s32 0, 0
    %p65 = scmp.eq.s32.totalorder 0, 0
    // Predicated region
    $region18: #{tpu_custom_call.1} parent=1 // pred_check
      %p66 = pneg %p65
    $region19: #{tpu_custom_call.1} parent=1 // pred_check_branch
      %68 = sbr.rel (%p66) target = $region21
    $region20: #{tpu_custom_call.1} parent=1 // pred_region
      %69 = vst [vmem:[#allocation7] sm:$0xff] 0.0
    $region21: #{tpu_custom_call.1} parent=1 // pred_fallthru
      _
    %v70 = vld [vmem:[#allocation5] sm:$0xff]
    %v71 = vld [vmem:[#allocation5 + $0x8] sm:$0xff]
    %v72 = vld [vmem:[#allocation2] sm:$0xff]
    %v73 = vld [vmem:[#allocation2 + $0x8] sm:$0xff]
    %v74 = vsub.f32 %v70, %v72
    %v75 = vsub.f32 %v71, %v73
    %p76 = scmp.lt.s32.totalorder %s64, 1
    // Predicated region
    $region22: #{tpu_custom_call.1} parent=1 // pred_check
      %p77 = pneg %p76
    $region23: #{tpu_custom_call.1} parent=1 // pred_check_branch
      %79 = sbr.rel (%p77) target = $region25
    $region24: #{tpu_custom_call.1} parent=1 // pred_region
      %v80 = vmul.f32 %v74, %v74
      %v81 = vmul.f32 %v75, %v75
      %v82 = vld [vmem:[#allocation7] sm:$0xff]
      %v83 = vadd.f32 %v80, %v81
      %v84 = vadd.f32 %v82, %v83
      %85 = vst [vmem:[#allocation7] sm:$0xff] %v84
    $region25: #{tpu_custom_call.1} parent=1 // pred_fallthru
      _
    %p86 = scmp.ge.s32.totalorder %s64, 1
    // Predicated region
    $region26: #{tpu_custom_call.1} parent=1 // pred_check
      %p87 = pneg %p86
    $region27: #{tpu_custom_call.1} parent=1 // pred_check_branch
      %89 = sbr.rel (%p87) target = $region29
    $region28: #{tpu_custom_call.1} parent=1 // pred_region
      %v90 = vlaneseq
      %v91 = vshrl.u32 %v90, 7
      %v92 = vadd.s32 %v91, 8
      %s93 = smul.u32 %s64, 16
      %v94 = vstv %s93
      %v95 = vadd.s32 %v91, %v94
      %v96 = vadd.s32 %v92, %v94
      %vm97 = vcmp.lt.s32.totalorder %v95, 16
      %vm98 = vcmp.lt.s32.totalorder %v96, 16
      %v99 = vsel %vm97, %v74, 0.0
      %v100 = vsel %vm98, %v75, 0.0
      %v101 = vmul.f32 %v99, %v99
      %v102 = vmul.f32 %v100, %v100
      %v103 = vld [vmem:[#allocation7] sm:$0xff]
      %v104 = vadd.f32 %v101, %v102
      %v105 = vadd.f32 %v103, %v104
      %106 = vst [vmem:[#allocation7] sm:$0xff] %v105
    $region29: #{tpu_custom_call.1} parent=1 // pred_fallthru
      _
    // Predicated region
    $region30: #{tpu_custom_call.1} parent=1 // pred_check
      _
    $region31: #{tpu_custom_call.1} parent=1 // pred_check_branch
      %108 = sbr.rel (0) target = $region33
    $region32: #{tpu_custom_call.1} parent=1 // pred_region
      %110 = vsyncadd [#allocation4], 0
      %s112 = sshll.u32 [#allocation7], 4
      %s113 = int_to_ptr.vmem [resolvable:$true] %s112
      %s114 = sshll.u32 %s2, 4
      %s115 = int_to_ptr.hbm [resolvable:$true] %s114
      %117 = dma.vmem_to_hbm [thread:$0]  %s113, 128, %s115, [#allocation4]
    $region33: #{tpu_custom_call.1} parent=1 // pred_fallthru
      _
    // Predicated region
    $region34: #{tpu_custom_call.1} parent=1 // pred_check
      _
    $region35: #{tpu_custom_call.1} parent=1 // pred_check_branch
      %119 = sbr.rel (0) target = $region37
    $region36: #{tpu_custom_call.1} parent=1 // pred_region
      %121 = dma.done [#allocation4], 128
    $region37: #{tpu_custom_call.1} parent=1 // pred_fallthru
      _
    %122 = vsyncpa [#allocation3], 1
    %123 = vsyncpa [#allocation6], 1
    %124 = vsyncpa [#allocation4], 1

</llo_original>
